<compile_context>
chip_gen: v7x
topology: tpu7x:2x2x1
jax: 0.10.0
libtpu: 0.0.40
codegen_flags: <defaults>
</compile_context>

<pallas_src>
import math
import functools

import jax
import jax.numpy as jnp
from jax.experimental import pallas as pl
from jax.experimental.pallas import tpu as pltpu

DTYPE = jnp.bfloat16


def _tile(dim, target, align):
    """Largest divisor of `dim` that is <= target and a multiple of `align`,
    falling back to the full dim (full-extent blocks are always legal)."""
    if dim <= target:
        return dim
    t = (target // align) * align
    while t >= align:
        if dim % t == 0:
            return t
        t -= align
    return dim


# --------------- fused input RMSNorm + [q|kv] projection kernel --------------
def _ln_qkv_kernel(x_ref, g_ref, w_ref, b_ref, o_ref, xn_ref, *, eps):
    # x_ref: (tm, H) bf16, g_ref: (1, H), w_ref: (H, tn) bf16, b_ref: (1, tn)
    @pl.when(pl.program_id(1) == 0)
    def _():
        x = x_ref[...].astype(jnp.float32)
        var = jnp.mean(x * x, axis=-1, keepdims=True)
        xn = x * jax.lax.rsqrt(var + eps) * g_ref[...].astype(jnp.float32)
        xn_ref[...] = xn.astype(xn_ref.dtype)          # cache normalized rows (bf16)

    y = jnp.dot(xn_ref[...], w_ref[...], preferred_element_type=jnp.float32)
    y = y + b_ref[...].astype(jnp.float32)
    o_ref[...] = y.astype(o_ref.dtype)


def ln_qkv_proj(x2d, ln_w, w_t, b, eps):
    M, H = x2d.shape
    N = w_t.shape[1]
    tm = _tile(M, 256, 8)
    tn = _tile(N, 512, 128)
    return pl.pallas_call(
        functools.partial(_ln_qkv_kernel, eps=eps),
        out_shape=jax.ShapeDtypeStruct((M, N), x2d.dtype),
        grid_spec=pltpu.PrefetchScalarGridSpec(
            num_scalar_prefetch=0,
            grid=(M // tm, N // tn),
            in_specs=[
                pl.BlockSpec((tm, H), lambda i, j: (i, 0)),
                pl.BlockSpec((1, H), lambda i, j: (0, 0)),
                pl.BlockSpec((H, tn), lambda i, j: (0, j)),
                pl.BlockSpec((1, tn), lambda i, j: (0, j)),
            ],
            out_specs=pl.BlockSpec((tm, tn), lambda i, j: (i, j)),
            scratch_shapes=[pltpu.VMEM((tm, H), x2d.dtype)],
        ),
        compiler_params=pltpu.CompilerParams(
            dimension_semantics=("parallel", "arbitrary")),
    )(x2d, ln_w.reshape(1, H), w_t, b.reshape(1, N))


# -------------------- flash attention (causal, GQA) kernel -------------------
def _flash_attn_kernel(q_ref, k_ref, v_ref, o_ref, m_ref, l_ref, acc_ref,
                       *, scale, tq, tk):
    qi = pl.program_id(1)
    ki = pl.program_id(2)

    @pl.when(ki == 0)
    def _():
        m_ref[...] = jnp.full_like(m_ref, -jnp.inf)
        l_ref[...] = jnp.zeros_like(l_ref)
        acc_ref[...] = jnp.zeros_like(acc_ref)

    q_start = qi * tq
    k_start = ki * tk

    # skip KV blocks that are entirely above the causal diagonal
    @pl.when(k_start <= q_start + tq - 1)
    def _():
        q = q_ref[0] * scale                                   # (tq, D) bf16, scale folded in
        k = k_ref[0]                                           # (tk, D) bf16
        v = v_ref[0]                                           # (tk, D) bf16
        s = jax.lax.dot_general(q, k, (((1,), (1,)), ((), ())),
                                preferred_element_type=jnp.float32)   # (tq, tk)
        row = q_start + jax.lax.broadcasted_iota(jnp.int32, (tq, tk), 0)
        col = k_start + jax.lax.broadcasted_iota(jnp.int32, (tq, tk), 1)
        s = jnp.where(col <= row, s, -jnp.inf)

        m_prev = m_ref[...]
        m_new = jnp.maximum(m_prev, jnp.max(s, axis=-1, keepdims=True))
        alpha = jnp.exp(m_prev - m_new)                        # EUP
        p = jnp.exp(s - m_new)                                 # EUP
        l_ref[...] = alpha * l_ref[...] + jnp.sum(p, axis=-1, keepdims=True)
        acc_ref[...] = alpha * acc_ref[...] + jnp.dot(
            p.astype(v.dtype), v, preferred_element_type=jnp.float32)
        m_ref[...] = m_new

    @pl.when(ki == pl.num_programs(2) - 1)
    def _():
        inv_l = pl.reciprocal(l_ref[...], approx=True)
        o_ref[0] = (acc_ref[...] * inv_l).astype(o_ref.dtype)


def flash_attention(q, k, v, scale, rep):
    # q: (B*nH, S, D), k/v: (B*nKV, S, D); query head i uses kv head i // rep.
    BHq, S, D = q.shape
    tq = _tile(S, 128, 8)
    tk = _tile(S, 128, 8)
    return pl.pallas_call(
        functools.partial(_flash_attn_kernel, scale=scale, tq=tq, tk=tk),
        out_shape=jax.ShapeDtypeStruct((BHq, S, D), q.dtype),
        grid_spec=pltpu.PrefetchScalarGridSpec(
            num_scalar_prefetch=0,
            grid=(BHq, S // tq, S // tk),
            in_specs=[
                pl.BlockSpec((1, tq, D), lambda i, qi, ki: (i, qi, 0)),
                pl.BlockSpec((1, tk, D), lambda i, qi, ki: (i // rep, ki, 0)),
                pl.BlockSpec((1, tk, D), lambda i, qi, ki: (i // rep, ki, 0)),
            ],
            out_specs=pl.BlockSpec((1, tq, D), lambda i, qi, ki: (i, qi, 0)),
            scratch_shapes=[
                pltpu.VMEM((tq, 1), jnp.float32),     # running max
                pltpu.VMEM((tq, 1), jnp.float32),     # running denom
                pltpu.VMEM((tq, D), jnp.float32),     # output accumulator
            ],
        ),
        compiler_params=pltpu.CompilerParams(
            dimension_semantics=("parallel", "parallel", "arbitrary")),
    )(q, k, v)


# --------------------- o-projection + residual add kernel --------------------
def _oproj_res_kernel(a_ref, w_ref, r_ref, o_ref):
    y = jnp.dot(a_ref[...], w_ref[...], preferred_element_type=jnp.float32)
    o_ref[...] = (y + r_ref[...].astype(jnp.float32)).astype(o_ref.dtype)


def oproj_residual(a2d, w_t, resid2d):
    M, H = a2d.shape
    N = w_t.shape[1]
    tm = _tile(M, 256, 8)
    tn = _tile(N, 512, 128)
    return pl.pallas_call(
        _oproj_res_kernel,
        out_shape=jax.ShapeDtypeStruct((M, N), a2d.dtype),
        grid_spec=pltpu.PrefetchScalarGridSpec(
            num_scalar_prefetch=0,
            grid=(M // tm, N // tn),
            in_specs=[
                pl.BlockSpec((tm, H), lambda i, j: (i, 0)),
                pl.BlockSpec((H, tn), lambda i, j: (0, j)),
                pl.BlockSpec((tm, tn), lambda i, j: (i, j)),
            ],
            out_specs=pl.BlockSpec((tm, tn), lambda i, j: (i, j)),
        ),
        compiler_params=pltpu.CompilerParams(
            dimension_semantics=("parallel", "parallel")),
    )(a2d, w_t, resid2d)


# ---------- fused post-LN + SwiGLU MLP (tiled over I) + residual kernel ------
def _ln_mlp_kernel(h_ref, g_ref, wg_ref, wu_ref, wd_ref, o_ref, xn_ref, acc_ref,
                   *, eps):
    j = pl.program_id(1)

    @pl.when(j == 0)
    def _():
        x = h_ref[...].astype(jnp.float32)
        var = jnp.mean(x * x, axis=-1, keepdims=True)
        xn = x * jax.lax.rsqrt(var + eps) * g_ref[...].astype(jnp.float32)
        xn_ref[...] = xn.astype(xn_ref.dtype)
        acc_ref[...] = jnp.zeros_like(acc_ref)

    xn = xn_ref[...]                                                   # (tm, H) bf16
    g = jnp.dot(xn, wg_ref[...], preferred_element_type=jnp.float32)   # (tm, ti)
    u = jnp.dot(xn, wu_ref[...], preferred_element_type=jnp.float32)   # (tm, ti)
    hswi = (g * jax.nn.sigmoid(g) * u).astype(wd_ref.dtype)            # bf16 for MXU
    acc_ref[...] += jnp.dot(hswi, wd_ref[...],
                            preferred_element_type=jnp.float32)        # (tm, H)

    @pl.when(j == pl.num_programs(1) - 1)
    def _():
        o_ref[...] = (acc_ref[...] + h_ref[...].astype(jnp.float32)).astype(o_ref.dtype)


def ln_mlp_residual(h2d, ln_w, wg_t, wu_t, wd_t, eps):
    M, H = h2d.shape
    I = wg_t.shape[1]
    tm = _tile(M, 256, 8)
    ti = _tile(I, 512, 128)
    return pl.pallas_call(
        functools.partial(_ln_mlp_kernel, eps=eps),
        out_shape=jax.ShapeDtypeStruct((M, H), h2d.dtype),
        grid_spec=pltpu.PrefetchScalarGridSpec(
            num_scalar_prefetch=0,
            grid=(M // tm, I // ti),
            in_specs=[
                pl.BlockSpec((tm, H), lambda i, j: (i, 0)),
                pl.BlockSpec((1, H), lambda i, j: (0, 0)),
                pl.BlockSpec((H, ti), lambda i, j: (0, j)),
                pl.BlockSpec((H, ti), lambda i, j: (0, j)),
                pl.BlockSpec((ti, H), lambda i, j: (j, 0)),
            ],
            out_specs=pl.BlockSpec((tm, H), lambda i, j: (i, 0)),
            scratch_shapes=[pltpu.VMEM((tm, H), h2d.dtype),
                            pltpu.VMEM((tm, H), jnp.float32)],
        ),
        compiler_params=pltpu.CompilerParams(
            dimension_semantics=("parallel", "arbitrary")),
    )(h2d, ln_w.reshape(1, H), wg_t, wu_t, wd_t)


# --------------------------------- RoPE (glue) -------------------------------
def _rotate_half(x):
    x1, x2 = jnp.split(x, 2, axis=-1)
    return jnp.concatenate([-x2, x1], axis=-1)


def apply_rope(q, k, cos, sin):
    # q: (B, S, Hq, D), k: (B, S, Hkv, D), cos/sin: (S, D) -- HF-style rotate_half
    c = cos[None, :, None, :].astype(jnp.float32)
    s = sin[None, :, None, :].astype(jnp.float32)
    qf = q.astype(jnp.float32)
    kf = k.astype(jnp.float32)
    q2 = qf * c + _rotate_half(qf) * s
    k2 = kf * c + _rotate_half(kf) * s
    return q2.astype(q.dtype), k2.astype(k.dtype)


# ---------------------------- Decoder layer forward --------------------------
def qwen2_decoder_layer(x, params, cos, sin, *, eps, qk_scale=None):
    B, S, H = x.shape
    nH, nKV, D = params["num_heads"], params["num_kv_heads"], params["head_dim"]
    rep = nH // nKV

    x2d = x.reshape(B * S, H)

    # fused input RMSNorm + single [q | kv] projection (one activation pass)
    qkv_w_t = jnp.concatenate([params["q_w_t"], params["kv_w_t"]], axis=1)
    qkv_b = jnp.concatenate([params["q_b"], params["kv_b"]], axis=0)
    qkv = ln_qkv_proj(x2d, params["input_ln_w"], qkv_w_t, qkv_b, eps)

    qdim, kvdim = nH * D, nKV * D
    xq = qkv[:, :qdim].reshape(B, S, nH, D)
    xk = qkv[:, qdim:qdim + kvdim].reshape(B, S, nKV, D)
    xv = qkv[:, qdim + kvdim:].reshape(B, S, nKV, D)

    xq, xk = apply_rope(xq, xk, cos, sin)

    # TODO(synk): atten_info.kv_buffer cache writeback omitted (stateless single forward).

    # (B, S, h, D) -> (B*h, S, D); transposes fuse with the RoPE elementwise ops.
    qt = xq.transpose(0, 2, 1, 3).reshape(B * nH, S, D)
    kt = xk.transpose(0, 2, 1, 3).reshape(B * nKV, S, D)
    vt = xv.transpose(0, 2, 1, 3).reshape(B * nKV, S, D)

    scale = qk_scale if qk_scale is not None else 1.0 / math.sqrt(D)
    attn = flash_attention(qt, kt, vt, scale, rep)

    attn2d = attn.reshape(B, nH, S, D).transpose(0, 2, 1, 3).reshape(B * S, H)

    # o-projection fused with the first residual add (no bias)
    h = oproj_residual(attn2d, params["o_w_t"], x2d)

    # fused post-attention RMSNorm + SwiGLU MLP + second residual add
    out = ln_mlp_residual(h, params["post_ln_w"], params["gate_w_t"],
                          params["up_w_t"], params["down_w_t"], eps)
    return out.reshape(B, S, H)


# ----------------------------------- main ------------------------------------
if __name__ == "__main__":
    # Small Qwen2-like config
    B, S = 2, 8
    hidden = 64
    num_heads = 4
    num_kv_heads = 2
    head_dim = hidden // num_heads      # 16
    intermediate = 128
    eps = 1e-6

    key = jax.random.PRNGKey(0)
    keys = jax.random.split(key, 10)

    def init(k, shape, scale=0.02):
        return (jax.random.normal(k, shape, dtype=jnp.float32) * scale).astype(DTYPE)

    params = {
        "num_heads": num_heads,
        "num_kv_heads": num_kv_heads,
        "head_dim": head_dim,
        "input_ln_w": jnp.ones((hidden,), dtype=DTYPE),
        "post_ln_w": jnp.ones((hidden,), dtype=DTYPE),
        # torch weights are (out, in); store transposed (in, out) for the kernels
        "q_w_t": init(keys[0], (hidden, hidden)),
        "q_b": init(keys[1], (hidden,)),
        "kv_w_t": init(keys[2], (hidden, num_kv_heads * head_dim * 2)),
        "kv_b": init(keys[3], (num_kv_heads * head_dim * 2,)),
        "o_w_t": init(keys[4], (hidden, hidden)),
        "gate_w_t": init(keys[5], (hidden, intermediate)),
        "up_w_t": init(keys[6], (hidden, intermediate)),
        "down_w_t": init(keys[7], (intermediate, hidden)),
    }

    # rotary embeddings (HF-style, base 10000)
    pos = jnp.arange(S, dtype=jnp.float32)
    inv_freq = 1.0 / (10000.0 ** (jnp.arange(0, head_dim, 2, dtype=jnp.float32) / head_dim))
    freqs = pos[:, None] * inv_freq[None, :]          # (S, D/2)
    emb = jnp.concatenate([freqs, freqs], axis=-1)    # (S, D)
    cos, sin = jnp.cos(emb), jnp.sin(emb)

    x = init(keys[8], (B, S, hidden), scale=1.0)

    out = qwen2_decoder_layer(x, params, cos, sin, eps=eps)
    out = jax.block_until_ready(out)

    assert out.shape == (B, S, hidden)
    assert out.dtype == DTYPE
    assert bool(jnp.all(jnp.isfinite(out.astype(jnp.float32))))
    print("KERNEL_OK")
</pallas_src>

<mosaic_0001>
module attributes {stable_mosaic.version = 11 : i64} {
  func.func @_ln_qkv_kernel(%arg0: i32, %arg1: i32, %arg2: memref<16x64xbf16, #tpu.memory_space<vmem>>, %arg3: memref<1x64xbf16, #tpu.memory_space<vmem>>, %arg4: memref<64x128xbf16, #tpu.memory_space<vmem>>, %arg5: memref<1x128xbf16, #tpu.memory_space<vmem>>, %arg6: memref<16x128xbf16, #tpu.memory_space<vmem>>, %arg7: memref<16x64xbf16, #tpu.memory_space<vmem>>) attributes {dimension_semantics = [#tpu.dimension_semantics<parallel>, #tpu.dimension_semantics<arbitrary>], iteration_bounds = array<i64: 1, 1>, scalar_prefetch = 0 : i64, scratch_operands = 1 : i64, tpu.core_type = #tpu.core_type<tc>, window_params = [{transform_indices = @transform_0, window_bounds = array<i64: 16, 64>}, {pipeline_mode = #tpu.pipeline_mode<synchronous>, transform_indices = @transform_1, window_bounds = array<i64: 1, 64>}, {transform_indices = @transform_2, window_bounds = array<i64: 64, 128>}, {transform_indices = @transform_3, window_bounds = array<i64: 1, 128>}, {transform_indices = @transform_4, window_bounds = array<i64: 16, 128>}]} {
    %c0_i32 = arith.constant 0 : i32
    %0 = arith.cmpi eq, %arg1, %c0_i32 : i32
    %1 = arith.extui %0 : i1 to i32
    %c0_i32_0 = arith.constant 0 : i32
    %2 = arith.cmpi ne, %1, %c0_i32_0 : i32
    scf.if %2 {
      %c0_8 = arith.constant 0 : index
      %c0_9 = arith.constant 0 : index
      %12 = vector.load %arg2[%c0_8, %c0_9] : memref<16x64xbf16, #tpu.memory_space<vmem>>, vector<16x64xbf16>
      %13 = arith.extf %12 : vector<16x64xbf16> to vector<16x64xf32>
      %14 = arith.mulf %13, %13 : vector<16x64xf32>
      %cst_10 = arith.constant dense<0.000000e+00> : vector<16xf32>
      %15 = vector.multi_reduction <add>, %14, %cst_10 [1] : vector<16x64xf32> to vector<16xf32>
      %16 = vector.shape_cast %15 : vector<16xf32> to vector<16x1xf32>
      %cst_11 = arith.constant 6.400000e+01 : f32
      %17 = vector.broadcast %cst_11 : f32 to vector<16x1xf32>
      %18 = arith.divf %16, %17 : vector<16x1xf32>
      %cst_12 = arith.constant 9.99999997E-7 : f32
      %19 = vector.broadcast %cst_12 : f32 to vector<16x1xf32>
      %20 = arith.addf %18, %19 : vector<16x1xf32>
      %21 = math.rsqrt %20 : vector<16x1xf32>
      %22 = vector.broadcast %21 : vector<16x1xf32> to vector<16x64xf32>
      %23 = arith.mulf %13, %22 : vector<16x64xf32>
      %c0_13 = arith.constant 0 : index
      %c0_14 = arith.constant 0 : index
      %24 = vector.load %arg3[%c0_13, %c0_14] : memref<1x64xbf16, #tpu.memory_space<vmem>>, vector<1x64xbf16>
      %25 = arith.extf %24 : vector<1x64xbf16> to vector<1x64xf32>
      %26 = vector.broadcast %25 : vector<1x64xf32> to vector<16x64xf32>
      %27 = arith.mulf %23, %26 : vector<16x64xf32>
      %28 = arith.truncf %27 : vector<16x64xf32> to vector<16x64xbf16>
      %c0_15 = arith.constant 0 : index
      %c0_16 = arith.constant 0 : index
      %29 = vector.load %arg7[%c0_15, %c0_16] : memref<16x64xbf16, #tpu.memory_space<vmem>>, vector<16x64xbf16>
      tpu.vector_store %arg7[%c0_15, %c0_16], %28 {strides = array<i32>} : memref<16x64xbf16, #tpu.memory_space<vmem>>, vector<16x64xbf16>,
    } else {
    }
    %c0 = arith.constant 0 : index
    %c0_1 = arith.constant 0 : index
    %3 = vector.load %arg7[%c0, %c0_1] : memref<16x64xbf16, #tpu.memory_space<vmem>>, vector<16x64xbf16>
    %c0_2 = arith.constant 0 : index
    %c0_3 = arith.constant 0 : index
    %4 = vector.load %arg4[%c0_2, %c0_3] : memref<64x128xbf16, #tpu.memory_space<vmem>>, vector<64x128xbf16>
    %cst = arith.constant dense<0.000000e+00> : vector<16x128xf32>
    %5 = tpu.matmul %3, %4, %cst {dimension_numbers = #tpu.dot_dimension_numbers<[1], [0], [0], [1], [0, 0, 1, 1], [], []>} : vector<16x64xbf16>, vector<64x128xbf16>, vector<16x128xf32> -> vector<16x128xf32>
    %c0_4 = arith.constant 0 : index
    %c0_5 = arith.constant 0 : index
    %6 = vector.load %arg5[%c0_4, %c0_5] : memref<1x128xbf16, #tpu.memory_space<vmem>>, vector<1x128xbf16>
    %7 = arith.extf %6 : vector<1x128xbf16> to vector<1x128xf32>
    %8 = vector.broadcast %7 : vector<1x128xf32> to vector<16x128xf32>
    %9 = arith.addf %5, %8 : vector<16x128xf32>
    %10 = arith.truncf %9 : vector<16x128xf32> to vector<16x128xbf16>
    %c0_6 = arith.constant 0 : index
    %c0_7 = arith.constant 0 : index
    %11 = vector.load %arg6[%c0_6, %c0_7] : memref<16x128xbf16, #tpu.memory_space<vmem>>, vector<16x128xbf16>
    tpu.vector_store %arg6[%c0_6, %c0_7], %10 {strides = array<i32>} : memref<16x128xbf16, #tpu.memory_space<vmem>>, vector<16x128xbf16>,
    return
  }
  func.func @transform_0(%arg0: i32, %arg1: i32) -> (i32, i32) {
    %c0_i32 = arith.constant 0 : i32
    %c0_i32_0 = arith.constant 0 : i32
    return %arg0, %c0_i32 : i32, i32
  }
  func.func @transform_1(%arg0: i32, %arg1: i32) -> (i32, i32) {
    %c0_i32 = arith.constant 0 : i32
    %c0_i32_0 = arith.constant 0 : i32
    %c0_i32_1 = arith.constant 0 : i32
    return %c0_i32, %c0_i32_0 : i32, i32
  }
  func.func @transform_2(%arg0: i32, %arg1: i32) -> (i32, i32) {
    %c0_i32 = arith.constant 0 : i32
    %c0_i32_0 = arith.constant 0 : i32
    return %c0_i32, %arg1 : i32, i32
  }
  func.func @transform_3(%arg0: i32, %arg1: i32) -> (i32, i32) {
    %c0_i32 = arith.constant 0 : i32
    %c0_i32_0 = arith.constant 0 : i32
    return %c0_i32, %arg1 : i32, i32
  }
  func.func @transform_4(%arg0: i32, %arg1: i32) -> (i32, i32) {
    %c0_i32 = arith.constant 0 : i32
    return %arg0, %arg1 : i32, i32
  }
}

</mosaic_0001>

<llo_original>
// kernel: tpu_custom_call.1
$region0: #{tpu_custom_call.1}
  #allocation0 [shape = 'u32[]', space=smem, size = 0x4, offset = 0x4, fixed_abs, tag = 'smem constant byte address 0x4 - core index']
  #allocation1 [shape = 'u32[144,128]{1,0:T(1,128)}', space=vmem, size = 0x12000, scoped, tag = 'internal scratch']
  #allocation2 [shape = 'bf16[16,64]{1,0:T(16,128)(2,1)}', space=vmem, size = 0x1000, scoped, tag = 'scratch operand']
  %s0 = inlined_call_operand.hbm [shape: bf16[16,64], index: 0, kind: input, shape index: {}]
  %s1 = inlined_call_operand.vmem [shape: bf16[1,64], index: 1, kind: input, shape index: {}]
  %s2 = inlined_call_operand.hbm [shape: bf16[64,128], index: 2, kind: input, shape index: {}]
  %s3 = inlined_call_operand.vmem [shape: bf16[1,128], index: 3, kind: input, shape index: {}]
  %s4 = inlined_call_operand.hbm [shape: bf16[16,128], index: 4, kind: output, shape index: {}]
  %s5 = sld [smem:[#allocation0]]
  $region38: #{tpu_custom_call.1} parent=0
    _
  %s7 = ssub.s32 1, %s5
  %s8 = scalar_select 0, %s7, %s5
  $region1: #{tpu_custom_call.1} parent=0
    #allocation3 [shape = 'u8[4096]{0}', space=vmem, size = 0x1000, scoped, tag = 'input window, operand 0, single buffered']
    #allocation4 [shape = 's32[1]{0}', space=sflag, size = 0x4, scoped, tag = 'scoped memory for tpu_custom_call.1']
    #allocation5 [shape = 's32[1]{0}', space=sflag, size = 0x4, scoped, tag = 'scoped memory for tpu_custom_call.1']
    #allocation6 [shape = 'u8[16384]{0}', space=vmem, size = 0x4000, scoped, tag = 'input window, operand 2, single buffered']
    #allocation7 [shape = 's32[1]{0}', space=sflag, size = 0x4, scoped, tag = 'scoped memory for tpu_custom_call.1']
    #allocation8 [shape = 'u8[4096]{0}', space=vmem, size = 0x1000, scoped, tag = 'output window, operand 0, single buffered']
    %9 = vsyncpa [#allocation4], 0
    %10 = vsyncpa [#allocation7], 0
    %11 = vsyncpa [#allocation5], 0
    // Predicated region
    $region2: #{tpu_custom_call.1} parent=1 // pred_check
      _
    $region3: #{tpu_custom_call.1} parent=1 // pred_check_branch
      %13 = sbr.rel (0) target = $region5
    $region4: #{tpu_custom_call.1} parent=1 // pred_region
      %s15 = ssub.s32 128, 128
      %16 = vsyncadd [#allocation4], %s15
      %s17 = sshll.u32 [#allocation3], 4
      %s18 = int_to_ptr.vmem [resolvable:$true] %s17
      %23 = dma.hbm_to_vmem [thread:$0]  %s0, 128, %s18, [#allocation4], 64, 64, 4
    $region5: #{tpu_custom_call.1} parent=1 // pred_fallthru
      _
    // Predicated region
    $region6: #{tpu_custom_call.1} parent=1 // pred_check
      _
    $region7: #{tpu_custom_call.1} parent=1 // pred_check_branch
      %25 = sbr.rel (0) target = $region9
    $region8: #{tpu_custom_call.1} parent=1 // pred_region
      _
    $region9: #{tpu_custom_call.1} parent=1 // pred_fallthru
      _
    // Predicated region
    $region10: #{tpu_custom_call.1} parent=1 // pred_check
      _
    $region11: #{tpu_custom_call.1} parent=1 // pred_check_branch
      %27 = sbr.rel (0) target = $region13
    $region12: #{tpu_custom_call.1} parent=1 // pred_region
      %s29 = ssub.s32 512, 512
      %30 = vsyncadd [#allocation7], %s29
      %s31 = sshll.u32 [#allocation6], 4
      %s32 = int_to_ptr.vmem [resolvable:$true] %s31
      %37 = dma.hbm_to_vmem [thread:$0]  %s2, 512, %s32, [#allocation7], 64, 64, 4
    $region13: #{tpu_custom_call.1} parent=1 // pred_fallthru
      _
    // Predicated region
    $region14: #{tpu_custom_call.1} parent=1 // pred_check
      _
    $region15: #{tpu_custom_call.1} parent=1 // pred_check_branch
      %39 = sbr.rel (0) target = $region17
    $region16: #{tpu_custom_call.1} parent=1 // pred_region
      _
    $region17: #{tpu_custom_call.1} parent=1 // pred_fallthru
      _
    // Predicated region
    $region18: #{tpu_custom_call.1} parent=1 // pred_check
      _
    $region19: #{tpu_custom_call.1} parent=1 // pred_check_branch
      %41 = sbr.rel (0) target = $region21
    $region20: #{tpu_custom_call.1} parent=1 // pred_region
      %42 = dma.done [#allocation4], 128
    $region21: #{tpu_custom_call.1} parent=1 // pred_fallthru
      _
    // Predicated region
    $region22: #{tpu_custom_call.1} parent=1 // pred_check
      _
    $region23: #{tpu_custom_call.1} parent=1 // pred_check_branch
      %44 = sbr.rel (0) target = $region25
    $region24: #{tpu_custom_call.1} parent=1 // pred_region
      %45 = dma.done [#allocation7], 512
    $region25: #{tpu_custom_call.1} parent=1 // pred_fallthru
      _
    %p47 = scmp.eq.s32.totalorder 0, 0
    // Predicated region
    $region26: #{tpu_custom_call.1} parent=1 // pred_check
      %p48 = pneg %p47
    $region27: #{tpu_custom_call.1} parent=1 // pred_check_branch
      %50 = sbr.rel (%p48) target = $region29
    $region28: #{tpu_custom_call.1} parent=1 // pred_region
      %v51 = vld [vmem:[#allocation3] sm:$0xf]
      %v52 = vld [vmem:[#allocation3 + $0x4] sm:$0xf]
      %v53 = vunpack.c.l.bf16 %v51
      %v54 = vunpack.c.l.bf16 %v52
      %v55 = vmul.f32 %v53, %v53
      %v56 = vmul.f32 %v54, %v54
      %vm57 = vcmask 523264
      %v58 = vsel %vm57, %v55, 0.0
      %59 = vadd.xlane.f32.xlu0 %v58
      %v60 = vpop.xlane.xlu0 %59
      %v61 = vsel %vm57, %v56, 0.0
      %62 = vadd.xlane.f32.xlu0 %v61
      %v63 = vpop.xlane.xlu0 %62
      %v64 = vrcp.pop 64.0
      %v65 = vmul.f32 %v60, %v64
      %v66 = vmul.f32 %v63, %v64
      %v67 = vadd.f32 %v65, 1e-06
      %v68 = vadd.f32 %v66, 1e-06
      %v69 = vrsqrt.pop %v67
      %v70 = vrsqrt.pop %v68
      %v71 = vmul.f32 %v53, %v69
      %v72 = vmul.f32 %v54, %v70
      %v73 = vld [vmem:[%s1] sm:$0x1]
      %v74 = vunpack.c.l.bf16 %v73
      %v75 = vlaneseq
      %v76 = vshrl.u32 %v75, 7
      %v77 = vsub.s32 0, %v76
      %v78 = vrot.slane %v74, %v77
      %v79 = vmul.f32 %v71, %v78
      %v80 = vmul.f32 %v72, %v78
      %v81 = vpack.c.bf16 %v80, %v79
      %82 = vst.msk [vmem:[#allocation2] sm:$0xff] %vm57, %v81
    $region29: #{tpu_custom_call.1} parent=1 // pred_fallthru
      _
    %v83 = vld [vmem:[#allocation2] sm:$0xff]
    %v84 = vld [vmem:[#allocation6] sm:$0xf]
    %v85 = vld [vmem:[#allocation6 + $0x4] sm:$0xf]
    %v86 = vld [vmem:[#allocation6 + $0x8] sm:$0xf]
    %v87 = vld [vmem:[#allocation6 + $0xc] sm:$0xf]
    %v88 = vld [vmem:[#allocation6 + $0x10] sm:$0xf]
    %v89 = vld [vmem:[#allocation6 + $0x14] sm:$0xf]
    %v90 = vld [vmem:[#allocation6 + $0x18] sm:$0xf]
    %v91 = vld [vmem:[#allocation6 + $0x1c] sm:$0xf]
    %v92 = vld [vmem:[%s3] sm:$0x1]
    %v93 = vunpack.c.l.bf16 %v92
    %v94 = vlaneseq
    %v95 = vshrl.u32 %v94, 7
    %v96 = vsub.s32 0, %v95
    %v97 = vrot.slane %v93, %v96
    %v106 = vunpack.c.l.b16 %v84
    %v107 = vunpack.c.l.b16 %v85
    %v108 = vunpack.c.l.b16 %v86
    %v109 = vunpack.c.l.b16 %v87
    %v110 = vunpack.c.l.b16 %v88
    %v111 = vunpack.c.l.b16 %v89
    %v112 = vunpack.c.l.b16 %v90
    %v113 = vunpack.c.l.b16 %v91
    %v114 = vpack.c.b16 %v107, %v106
    %v115 = vpack.c.b16 %v109, %v108
    %v116 = vpack.c.b16 %v111, %v110
    %v117 = vpack.c.b16 %v113, %v112
    %vm122 = vcmask 523264
    %v124 = vsel %vm122, %v83, 0
    %126 = vmatprep.subr.bf16.mxu0 0
    %127 = vmatpush1.bf16.msra.mxu0 %v114
    %128 = vmatprep.subr.bf16.mxu0 0
    %129 = vmatpush1.bf16.msra.mxu0 %v115
    %130 = vmatprep.subr.bf16.mxu0 0
    %131 = vmatpush1.bf16.msra.mxu0 %v116
    %132 = vmatprep.subr.bf16.mxu0 0
    %133 = vmatpush1.bf16.msra.mxu0 %v117
    %134 = vmatprep.subr.bf16.mxu0 0
    %135 = vmatpush1.bf16.msra.mxu0 0
    %136 = vmatprep.subr.bf16.mxu0 0
    %137 = vmatpush1.bf16.msra.mxu0 0
    %138 = vmatprep.subr.bf16.mxu0 0
    %139 = vmatpush1.bf16.msra.mxu0 0
    %140 = vmatprep.subr.bf16.mxu0 0
    %141 = vmatpush1.bf16.msra.mxu0 0
    %142 = vmatprep.subr.bf16.mxu0 0
    %143 = vmatpush1.bf16.msra.mxu0 0
    %144 = vmatprep.subr.bf16.mxu0 0
    %145 = vmatpush1.bf16.msra.mxu0 0
    %146 = vmatprep.subr.bf16.mxu0 0
    %147 = vmatpush1.bf16.msra.mxu0 0
    %148 = vmatprep.subr.bf16.mxu0 0
    %149 = vmatpush1.bf16.msra.mxu0 0
    %150 = vmatprep.subr.bf16.mxu0 0
    %151 = vmatpush1.bf16.msra.mxu0 0
    %152 = vmatprep.subr.bf16.mxu0 0
    %153 = vmatpush1.bf16.msra.mxu0 0
    %154 = vmatprep.subr.bf16.mxu0 0
    %155 = vmatpush1.bf16.msra.mxu0 0
    %156 = vmatprep.subr.bf16.mxu0 0
    %157 = vmatpush1.bf16.msra.mxu0 0
    %158 = vmatprep.mubr.bf16.mxu0 0
    %159 = vmatmul.mubr.bf16.gmra.mrb[0].mxu0 %v124
    %v160 = vpop.f32.mrb[0].mxu0
    %v161 = vadd.f32 %v97, %v160
    %v162 = vpop.f32.mrb[0].mxu0
    %v163 = vpop.f32.mrb[0].mxu0
    %v164 = vadd.f32 %v97, %v163
    %v165 = vpop.f32.mrb[0].mxu0
    %166 = vdwg.mxu0
    %v167 = vpack.c.bf16 %v164, %v161
    %v169 = vunpack.c.l.b16 %v167
    %v170 = vunpack.c.h.b16 %v167
    %v171 = vpack.c.b16 %v169, %v169
    %v172 = vpack.c.b16 %v170, %v170
    %175 = vst [vmem:[#allocation8] sm:$0xf] %v171
    %176 = vst [vmem:[#allocation8 + $0x4] sm:$0xf] %v172
    // Predicated region
    $region30: #{tpu_custom_call.1} parent=1 // pred_check
      _
    $region31: #{tpu_custom_call.1} parent=1 // pred_check_branch
      %178 = sbr.rel (0) target = $region33
    $region32: #{tpu_custom_call.1} parent=1 // pred_region
      %s180 = ssub.s32 128, 128
      %181 = vsyncadd [#allocation5], %s180
      %s182 = sshll.u32 [#allocation8], 4
      %s183 = int_to_ptr.vmem [resolvable:$true] %s182
      %188 = dma.vmem_to_hbm [thread:$0]  %s183, 128, %s4, [#allocation5], 64, 64, 4
    $region33: #{tpu_custom_call.1} parent=1 // pred_fallthru
      _
    // Predicated region
    $region34: #{tpu_custom_call.1} parent=1 // pred_check
      _
    $region35: #{tpu_custom_call.1} parent=1 // pred_check_branch
      %190 = sbr.rel (0) target = $region37
    $region36: #{tpu_custom_call.1} parent=1 // pred_region
      %191 = dma.done [#allocation5], 128
    $region37: #{tpu_custom_call.1} parent=1 // pred_fallthru
      _
    %192 = vsyncpa [#allocation4], 1
    %193 = vsyncpa [#allocation7], 1
    %194 = vsyncpa [#allocation5], 1

</llo_original>
